<compile_context>
chip_gen: v7x
topology: tpu7x:2x2x1
jax: 0.10.0
libtpu: 0.0.40
codegen_flags: <defaults>
</compile_context>

<pallas_src>
import functools

import jax
import jax.numpy as jnp
from jax.experimental import pallas as pl
from jax.experimental.pallas import tpu as pltpu

BN_EPS = 1e-5


# --------------------------- kernel 1: conv + BN statistics ---------------------------

def _conv_stats_kernel(xpad_ref, wt_ref, y_ref, sum_ref, ssq_ref, sum_sc, ssq_sc, *,
                       H, KH, ipb):
    """grid = (B // ipb,), sequential (shared BN-stat accumulation).

    Per step: conv for `ipb` images as KH accumulated bf16 matmuls (f32 accumulation),
    written as a lane-dense [ipb, H, W*C_total] y block, plus lane-dense (8, W*C_total)
    BN sum / sum-of-squares partials accumulated in VMEM scratch (no per-step cross-lane
    reduction; the collapse happens once in the wrapper).
    """
    step = pl.program_id(0)
    wc = wt_ref.shape[-1]
    wpc = wt_ref.shape[-2]

    xp = xpad_ref[...]                                   # [ipb, Hp, Wp*Cin] bf16
    acc = jnp.zeros((ipb * H, wc), jnp.float32)
    for dh in range(KH):                                 # static, short (KH <= ~7)
        xs = xp[:, dh:dh + H, :].reshape(ipb * H, wpc)
        acc = acc + jnp.dot(xs, wt_ref[dh], preferred_element_type=jnp.float32)

    y_ref[...] = acc.reshape(y_ref.shape)                # lane-dense write (W*C lanes)

    # Lane-dense (8, W*C) sublane partials: pure VPU tile adds, no XLU per step.
    rows = acc.shape[0]
    pad = (-rows) % 8
    accp = jnp.pad(acc, ((0, pad), (0, 0))) if pad else acc
    part_sum = accp.reshape(-1, 8, wc).sum(axis=0)
    part_ssq = (accp * accp).reshape(-1, 8, wc).sum(axis=0)

    @pl.when(step == 0)
    def _init():
        sum_sc[...] = jnp.zeros_like(sum_sc)
        ssq_sc[...] = jnp.zeros_like(ssq_sc)

    sum_sc[...] += part_sum
    ssq_sc[...] += part_ssq
    # Unconditional copy to the pinned output blocks (only the final flush reaches HBM).
    sum_ref[...] = sum_sc[...]
    ssq_ref[...] = ssq_sc[...]


# ------------------------- kernel 2: folded BN + ReLU + pool --------------------------

def _bn_relu_pool_kernel(y_ref, s_ref, t_ref, ah_ref, pmat_ref, out_ref, *, H, ipb):
    """grid = (B // ipb,), fully parallel over images (megacore-friendly).

    act = max(y*s + t, 0) on the lane-dense [ipb*H, W*C] block, then
    ZeroPad2d + AvgPool2d as two dense matmuls:
      row pool:    block-diag 0/1 matrix  [ipb*Ho, ipb*H] @ act          -> [ipb*Ho, W*C]
      column pool: per-channel matrix     hsum @ [W*C, Wo*C] (x 1/(ph*pw)) -> lane-dense out
    """
    wc = y_ref.shape[-1]
    y = y_ref[...].reshape(ipb * H, wc)
    act = jnp.maximum(y * s_ref[...] + t_ref[...], 0.0)                     # [ipb*H, W*C]
    hsum = jnp.dot(ah_ref[...], act, preferred_element_type=jnp.float32)    # [ipb*Ho, W*C]
    pooled = jnp.dot(hsum, pmat_ref[...], preferred_element_type=jnp.float32)
    out_ref[...] = pooled.reshape(out_ref.shape)                            # [ipb,Ho,Wo*C]


# ---------------------------------- small helpers -------------------------------------

def _same_pad_amounts(k):
    # Matches PyTorch Conv2d(padding='same'): begin = (k-1)//2, end = (k-1) - (k-1)//2.
    total = k - 1
    lo = total // 2
    return lo, total - lo


def _output_spatial(H, W, avg_pool_size):
    ph, pw = avg_pool_size
    pad_rb = avg_pool_size[0] - 1      # module pads right & bottom by avg_pool_size[0]-1
    Ho = (H + pad_rb - ph) // ph + 1
    Wo = (W + pad_rb - pw) // pw + 1
    return Ho, Wo, pad_rb


def _largest_divisor_at_most(n, cap):
    cap = max(1, min(n, int(cap)))
    for d in range(cap, 0, -1):
        if n % d == 0:
            return d
    return 1


def _vmem_limit(block_bytes):
    # Explicit scoped-VMEM limit from the chosen block sizes (double-buffering + margin),
    # capped safely under v7x's 64 MiB physical budget.
    return int(min(60 * 2**20, max(16 * 2**20, 4 * block_bytes)))


# ------------------------------------ wrapper -----------------------------------------

def mp_conv_forward(x_nchw, params, conv_sizes, avg_pool_size):
    B, Cin, H, W = x_nchw.shape
    ph, pw = avg_pool_size
    Ho, Wo, _ = _output_spatial(H, W, avg_pool_size)
    n_paths = len(conv_sizes)
    Cout = params[0]['w'].shape[-1]
    C = n_paths * Cout
    KH = max(k for k, _ in conv_sizes)
    KW = max(k for _, k in conv_sizes)
    h_lo, h_hi = _same_pad_amounts(KH)
    w_lo, w_hi = _same_pad_amounts(KW)
    Hp, Wp = H + KH - 1, W + KW - 1
    WPC = Wp * Cin
    WC = W * C
    WoC = Wo * C

    # Padded bf16 NHWC input [B, Hp, Wp*Cin] — the only activation stream into call 1.
    x_nhwc = jnp.transpose(x_nchw, (0, 2, 3, 1))
    x_pad = jnp.pad(x_nhwc, ((0, 0), (h_lo, h_hi), (w_lo, w_hi), (0, 0)))
    x_pad = x_pad.reshape(B, Hp, WPC).astype(jnp.bfloat16)

    # All towers zero-embedded into the max 'same' kernel (torch channel-concat order),
    # expanded along W into KH Toeplitz matrices [Wp*Cin, W*C_total].
    # Conv bias omitted: train-mode BN mean-subtraction cancels it exactly.
    w_full = jnp.zeros((KH, KW, Cin, C), jnp.float32)
    gammas, betas = [], []
    for t, ((kh, kw), p) in enumerate(zip(conv_sizes, params)):
        oh = (KH - 1) // 2 - (kh - 1) // 2
        ow = (KW - 1) // 2 - (kw - 1) // 2
        w_full = w_full.at[oh:oh + kh, ow:ow + kw, :,
                           t * Cout:(t + 1) * Cout].set(p['w'])
        gammas.append(p['gamma'])
        betas.append(p['beta'])
    gamma = jnp.concatenate(gammas).astype(jnp.float32)              # [C_total]
    beta = jnp.concatenate(betas).astype(jnp.float32)

    wp_i = jnp.arange(Wp)[:, None]
    w_i = jnp.arange(W)[None, :]
    dw = wp_i - w_i                                                  # [Wp, W]
    valid = ((dw >= 0) & (dw < KW)).astype(jnp.float32)
    wt5 = w_full[:, jnp.clip(dw, 0, KW - 1), :, :] * valid[None, :, :, None, None]
    wt = jnp.transpose(wt5, (0, 1, 3, 2, 4)).reshape(KH, WPC, WC).astype(jnp.bfloat16)

    # ------------------------- call 1: conv + BN statistics ---------------------------
    per_img1 = Hp * WPC * 2 + H * WC * 4
    ipb1 = _largest_divisor_at_most(B, max(1, (4 << 20) // per_img1))
    grid1 = B // ipb1
    block1_bytes = 2 * ipb1 * per_img1 + KH * WPC * WC * 2 + 4 * 8 * WC * 4
    kern1 = functools.partial(_conv_stats_kernel, H=H, KH=KH, ipb=ipb1)
    y, sum8, ssq8 = pl.pallas_call(
        kern1,
        out_shape=(jax.ShapeDtypeStruct((B, H, WC), jnp.float32),
                   jax.ShapeDtypeStruct((8, WC), jnp.float32),
                   jax.ShapeDtypeStruct((8, WC), jnp.float32)),
        grid=(grid1,),
        in_specs=[pl.BlockSpec((ipb1, Hp, WPC), lambda i: (i, 0, 0)),
                  pl.BlockSpec((KH, WPC, WC), lambda i: (0, 0, 0))],
        out_specs=(pl.BlockSpec((ipb1, H, WC), lambda i: (i, 0, 0)),
                   pl.BlockSpec((8, WC), lambda i: (0, 0)),
                   pl.BlockSpec((8, WC), lambda i: (0, 0))),
        scratch_shapes=[pltpu.VMEM((8, WC), jnp.float32),
                        pltpu.VMEM((8, WC), jnp.float32)],
        compiler_params=pltpu.CompilerParams(
            dimension_semantics=("arbitrary",),          # shared BN-stat accumulators
            vmem_limit_bytes=_vmem_limit(block1_bytes)),
        cost_estimate=pl.CostEstimate(
            flops=2 * B * H * WPC * WC * KH, transcendentals=0,
            bytes_accessed=x_pad.size * 2 + wt.size * 2 + B * H * WC * 4 + 2 * 8 * WC * 4),
    )(x_pad, wt)

    # --------------- BN fold between the calls (plain JAX on tiny vectors) ------------
    m = float(B * H * W)
    ch_sum = sum8.reshape(8, W, C).sum(axis=(0, 1))
    ch_ssq = ssq8.reshape(8, W, C).sum(axis=(0, 1))
    mean = ch_sum / m
    var = jnp.maximum(ch_ssq / m - mean * mean, 0.0)     # clamp one-pass variance
    s = gamma * jax.lax.rsqrt(var + BN_EPS)
    t = beta - mean * s
    s_tiled = jnp.tile(s, W)[None, :]                    # [1, W*C_total], lane = w*C + c
    t_tiled = jnp.tile(t, W)[None, :]

    # Pooling matrices for ZeroPad2d((0, ph-1, 0, ph-1)) + AvgPool2d((ph, pw)).
    h_i = jnp.arange(H)[None, :]
    j_i = jnp.arange(Ho)[:, None]
    ah = ((h_i >= j_i * ph) & (h_i < j_i * ph + ph)).astype(jnp.float32)   # [Ho, H] 0/1

    wl = jnp.arange(W)[None, :]
    jo = jnp.arange(Wo)[:, None]
    aw = ((wl >= jo * pw) & (wl < jo * pw + pw)).astype(jnp.float32) / float(ph * pw)
    pmat = (aw.T[:, None, :, None] * jnp.eye(C, dtype=jnp.float32)[None, :, None, :]
            ).reshape(WC, WoC)                            # [W*C, Wo*C], scaled 1/(ph*pw)

    # --------------------- call 2: folded BN + ReLU + average pool --------------------
    per_img2 = H * WC * 4 + Ho * WoC * 4
    cap2 = max(1, (4 << 20) // per_img2)
    if B >= 2:
        cap2 = min(cap2, B // 2)      # keep >= 2 parallel grid steps for megacore / v7x
    ipb2 = _largest_divisor_at_most(B, cap2)
    grid2 = B // ipb2
    ahb = jnp.kron(jnp.eye(ipb2, dtype=jnp.float32), ah)  # block-diag over images in a block
    block2_bytes = (2 * ipb2 * per_img2 + WC * WoC * 4
                    + (ipb2 * Ho) * (ipb2 * H) * 4 + 2 * WC * 4)
    kern2 = functools.partial(_bn_relu_pool_kernel, H=H, ipb=ipb2)
    out = pl.pallas_call(
        kern2,
        out_shape=jax.ShapeDtypeStruct((B, Ho, WoC), jnp.float32),
        grid=(grid2,),
        in_specs=[pl.BlockSpec((ipb2, H, WC), lambda i: (i, 0, 0)),
                  pl.BlockSpec((1, WC), lambda i: (0, 0)),
                  pl.BlockSpec((1, WC), lambda i: (0, 0)),
                  pl.BlockSpec((ipb2 * Ho, ipb2 * H), lambda i: (0, 0)),
                  pl.BlockSpec((WC, WoC), lambda i: (0, 0))],
        out_specs=pl.BlockSpec((ipb2, Ho, WoC), lambda i: (i, 0, 0)),
        compiler_params=pltpu.CompilerParams(
            dimension_semantics=("parallel",),
            vmem_limit_bytes=_vmem_limit(block2_bytes)),
        cost_estimate=pl.CostEstimate(
            flops=2 * B * Ho * H * WC + 2 * B * Ho * WC * WoC + 4 * B * H * WC,
            transcendentals=0,
            bytes_accessed=B * H * WC * 4 + B * Ho * WoC * 4 + WC * WoC * 4),
    )(y, s_tiled, t_tiled, ahb, pmat)

    out4 = out.reshape(B, Ho, Wo, C)
    return jnp.transpose(out4, (0, 3, 1, 2))              # NCHW, torch concat order


# ------------------------------ pure-JAX reference ------------------------------------

def mp_conv_reference(x_nchw, params, conv_sizes, avg_pool_size):
    """f32 reference mirroring the PyTorch forward (training-mode BN, with conv bias)."""
    B, Cin, H, W = x_nchw.shape
    ph, pw = avg_pool_size
    Ho, Wo, pad_rb = _output_spatial(H, W, avg_pool_size)
    x_nhwc = jnp.transpose(x_nchw, (0, 2, 3, 1))
    outs = []
    for (kh, kw), p in zip(conv_sizes, params):
        Cout = p['w'].shape[-1]
        h_lo, h_hi = _same_pad_amounts(kh)
        w_lo, w_hi = _same_pad_amounts(kw)
        y = jax.lax.conv_general_dilated(
            x_nhwc, p['w'], window_strides=(1, 1),
            padding=((h_lo, h_hi), (w_lo, w_hi)),
            dimension_numbers=('NHWC', 'HWIO', 'NHWC'),
            precision=jax.lax.Precision.HIGHEST) + p['b']
        mean = jnp.mean(y, axis=(0, 1, 2), keepdims=True)
        var = jnp.mean((y - mean) ** 2, axis=(0, 1, 2), keepdims=True)
        act = jnp.maximum((y - mean) / jnp.sqrt(var + BN_EPS) * p['gamma'] + p['beta'], 0.0)
        padded = jnp.pad(act, ((0, 0), (0, pad_rb), (0, pad_rb), (0, 0)))
        cropped = padded[:, :Ho * ph, :Wo * pw, :]
        pooled = cropped.reshape(B, Ho, ph, Wo, pw, Cout).mean(axis=(2, 4))
        outs.append(jnp.transpose(pooled, (0, 3, 1, 2)))
    return jnp.concatenate(outs, axis=1)


if __name__ == "__main__":
    key = jax.random.PRNGKey(0)

    # MP_Conv(in_channels=4, conv_channels=8, conv_sizes=[(3,3),(5,5)],
    #         avg_pool_size=(2,2)) on an MFCC-like NCHW input.
    B, Cin, H, W = 2, 4, 16, 16
    conv_channels = 8
    conv_sizes = [(3, 3), (5, 5)]
    avg_pool_size = (2, 2)

    key, kx = jax.random.split(key)
    x = jax.random.normal(kx, (B, Cin, H, W), dtype=jnp.float32)

    params = []
    for (kh, kw) in conv_sizes:
        key, k_w, k_b, k_g, k_be = jax.random.split(key, 5)
        params.append(dict(
            w=0.1 * jax.random.normal(k_w, (kh, kw, Cin, conv_channels), dtype=jnp.float32),
            b=0.1 * jax.random.normal(k_b, (conv_channels,), dtype=jnp.float32),
            gamma=1.0 + 0.1 * jax.random.normal(k_g, (conv_channels,), dtype=jnp.float32),
            beta=0.1 * jax.random.normal(k_be, (conv_channels,), dtype=jnp.float32),
        ))

    out = mp_conv_forward(x, params, conv_sizes, avg_pool_size)
    out = jax.block_until_ready(out)

    Ho, Wo, _ = _output_spatial(H, W, avg_pool_size)
    assert out.shape == (B, conv_channels * len(conv_sizes), Ho, Wo), out.shape

    ref = mp_conv_reference(x, params, conv_sizes, avg_pool_size)
    max_err = float(jnp.max(jnp.abs(out - ref)))
    assert jnp.allclose(out, ref, rtol=5e-2, atol=5e-2), f"max abs err = {max_err}"

    print("KERNEL_OK")
</pallas_src>

<mosaic_0001>
module attributes {stable_mosaic.version = 11 : i64} {
  func.func @_conv_stats_kernel(%arg0: i32, %arg1: memref<2x20x80xbf16, #tpu.memory_space<vmem>>, %arg2: memref<5x80x256xbf16, #tpu.memory_space<vmem>>, %arg3: memref<2x16x256xf32, #tpu.memory_space<vmem>>, %arg4: memref<8x256xf32, #tpu.memory_space<vmem>>, %arg5: memref<8x256xf32, #tpu.memory_space<vmem>>, %arg6: memref<8x256xf32, #tpu.memory_space<vmem>>, %arg7: memref<8x256xf32, #tpu.memory_space<vmem>>) attributes {dimension_semantics = [#tpu.dimension_semantics<arbitrary>], iteration_bounds = array<i64: 1>, scalar_prefetch = 0 : i64, scratch_operands = 2 : i64, tpu.core_type = #tpu.core_type<tc>, window_params = [{transform_indices = @transform_0, window_bounds = array<i64: 2, 20, 80>}, {pipeline_mode = #tpu.pipeline_mode<synchronous>, transform_indices = @transform_1, window_bounds = array<i64: 5, 80, 256>}, {transform_indices = @transform_2, window_bounds = array<i64: 2, 16, 256>}, {pipeline_mode = #tpu.pipeline_mode<synchronous>, transform_indices = @transform_3, window_bounds = array<i64: 8, 256>}, {pipeline_mode = #tpu.pipeline_mode<synchronous>, transform_indices = @transform_4, window_bounds = array<i64: 8, 256>}]} {
    %c0 = arith.constant 0 : index
    %c0_0 = arith.constant 0 : index
    %c0_1 = arith.constant 0 : index
    %0 = vector.load %arg1[%c0, %c0_0, %c0_1] : memref<2x20x80xbf16, #tpu.memory_space<vmem>>, vector<2x20x80xbf16>
    %cst = arith.constant 0.000000e+00 : f32
    %1 = vector.broadcast %cst : f32 to vector<32x256xf32>
    %2 = vector.extract_strided_slice %0 {offsets = [0, 0, 0], sizes = [2, 16, 80], strides = [1, 1, 1]} : vector<2x20x80xbf16> to vector<2x16x80xbf16>
    %3 = vector.shape_cast %2 : vector<2x16x80xbf16> to vector<32x80xbf16>
    %c0_2 = arith.constant 0 : index
    %c0_3 = arith.constant 0 : index
    %c0_4 = arith.constant 0 : index
    %4 = vector.load %arg2[%c0_2, %c0_3, %c0_4] : memref<5x80x256xbf16, #tpu.memory_space<vmem>>, vector<1x80x256xbf16>
    %5 = vector.shape_cast %4 : vector<1x80x256xbf16> to vector<80x256xbf16>
    %cst_5 = arith.constant dense<0.000000e+00> : vector<32x256xf32>
    %6 = tpu.matmul %3, %5, %cst_5 {dimension_numbers = #tpu.dot_dimension_numbers<[1], [0], [0], [1], [0, 0, 1, 1], [], []>} : vector<32x80xbf16>, vector<80x256xbf16>, vector<32x256xf32> -> vector<32x256xf32>
    %7 = arith.addf %1, %6 : vector<32x256xf32>
    %8 = vector.extract_strided_slice %0 {offsets = [0, 1, 0], sizes = [2, 16, 80], strides = [1, 1, 1]} : vector<2x20x80xbf16> to vector<2x16x80xbf16>
    %9 = vector.shape_cast %8 : vector<2x16x80xbf16> to vector<32x80xbf16>
    %c1 = arith.constant 1 : index
    %c0_6 = arith.constant 0 : index
    %c0_7 = arith.constant 0 : index
    %10 = vector.load %arg2[%c1, %c0_6, %c0_7] : memref<5x80x256xbf16, #tpu.memory_space<vmem>>, vector<1x80x256xbf16>
    %11 = vector.shape_cast %10 : vector<1x80x256xbf16> to vector<80x256xbf16>
    %cst_8 = arith.constant dense<0.000000e+00> : vector<32x256xf32>
    %12 = tpu.matmul %9, %11, %cst_8 {dimension_numbers = #tpu.dot_dimension_numbers<[1], [0], [0], [1], [0, 0, 1, 1], [], []>} : vector<32x80xbf16>, vector<80x256xbf16>, vector<32x256xf32> -> vector<32x256xf32>
    %13 = arith.addf %7, %12 : vector<32x256xf32>
    %14 = vector.extract_strided_slice %0 {offsets = [0, 2, 0], sizes = [2, 16, 80], strides = [1, 1, 1]} : vector<2x20x80xbf16> to vector<2x16x80xbf16>
    %15 = vector.shape_cast %14 : vector<2x16x80xbf16> to vector<32x80xbf16>
    %c2 = arith.constant 2 : index
    %c0_9 = arith.constant 0 : index
    %c0_10 = arith.constant 0 : index
    %16 = vector.load %arg2[%c2, %c0_9, %c0_10] : memref<5x80x256xbf16, #tpu.memory_space<vmem>>, vector<1x80x256xbf16>
    %17 = vector.shape_cast %16 : vector<1x80x256xbf16> to vector<80x256xbf16>
    %cst_11 = arith.constant dense<0.000000e+00> : vector<32x256xf32>
    %18 = tpu.matmul %15, %17, %cst_11 {dimension_numbers = #tpu.dot_dimension_numbers<[1], [0], [0], [1], [0, 0, 1, 1], [], []>} : vector<32x80xbf16>, vector<80x256xbf16>, vector<32x256xf32> -> vector<32x256xf32>
    %19 = arith.addf %13, %18 : vector<32x256xf32>
    %20 = vector.extract_strided_slice %0 {offsets = [0, 3, 0], sizes = [2, 16, 80], strides = [1, 1, 1]} : vector<2x20x80xbf16> to vector<2x16x80xbf16>
    %21 = vector.shape_cast %20 : vector<2x16x80xbf16> to vector<32x80xbf16>
    %c3 = arith.constant 3 : index
    %c0_12 = arith.constant 0 : index
    %c0_13 = arith.constant 0 : index
    %22 = vector.load %arg2[%c3, %c0_12, %c0_13] : memref<5x80x256xbf16, #tpu.memory_space<vmem>>, vector<1x80x256xbf16>
    %23 = vector.shape_cast %22 : vector<1x80x256xbf16> to vector<80x256xbf16>
    %cst_14 = arith.constant dense<0.000000e+00> : vector<32x256xf32>
    %24 = tpu.matmul %21, %23, %cst_14 {dimension_numbers = #tpu.dot_dimension_numbers<[1], [0], [0], [1], [0, 0, 1, 1], [], []>} : vector<32x80xbf16>, vector<80x256xbf16>, vector<32x256xf32> -> vector<32x256xf32>
    %25 = arith.addf %19, %24 : vector<32x256xf32>
    %26 = vector.extract_strided_slice %0 {offsets = [0, 4, 0], sizes = [2, 16, 80], strides = [1, 1, 1]} : vector<2x20x80xbf16> to vector<2x16x80xbf16>
    %27 = vector.shape_cast %26 : vector<2x16x80xbf16> to vector<32x80xbf16>
    %c4 = arith.constant 4 : index
    %c0_15 = arith.constant 0 : index
    %c0_16 = arith.constant 0 : index
    %28 = vector.load %arg2[%c4, %c0_15, %c0_16] : memref<5x80x256xbf16, #tpu.memory_space<vmem>>, vector<1x80x256xbf16>
    %29 = vector.shape_cast %28 : vector<1x80x256xbf16> to vector<80x256xbf16>
    %cst_17 = arith.constant dense<0.000000e+00> : vector<32x256xf32>
    %30 = tpu.matmul %27, %29, %cst_17 {dimension_numbers = #tpu.dot_dimension_numbers<[1], [0], [0], [1], [0, 0, 1, 1], [], []>} : vector<32x80xbf16>, vector<80x256xbf16>, vector<32x256xf32> -> vector<32x256xf32>
    %31 = arith.addf %25, %30 : vector<32x256xf32>
    %32 = vector.shape_cast %31 : vector<32x256xf32> to vector<2x16x256xf32>
    %c0_18 = arith.constant 0 : index
    %c0_19 = arith.constant 0 : index
    %c0_20 = arith.constant 0 : index
    %33 = vector.load %arg3[%c0_18, %c0_19, %c0_20] : memref<2x16x256xf32, #tpu.memory_space<vmem>>, vector<2x16x256xf32>
    tpu.vector_store %arg3[%c0_18, %c0_19, %c0_20], %32 {strides = array<i32>} : memref<2x16x256xf32, #tpu.memory_space<vmem>>, vector<2x16x256xf32>,
    %34 = vector.shape_cast %31 : vector<32x256xf32> to vector<4x8x256xf32>
    %cst_21 = arith.constant dense<0.000000e+00> : vector<8x256xf32>
    %35 = vector.multi_reduction <add>, %34, %cst_21 [0] : vector<4x8x256xf32> to vector<8x256xf32>
    %36 = arith.mulf %31, %31 : vector<32x256xf32>
    %37 = vector.shape_cast %36 : vector<32x256xf32> to vector<4x8x256xf32>
    %cst_22 = arith.constant dense<0.000000e+00> : vector<8x256xf32>
    %38 = vector.multi_reduction <add>, %37, %cst_22 [0] : vector<4x8x256xf32> to vector<8x256xf32>
    %c0_i32 = arith.constant 0 : i32
    %39 = arith.cmpi eq, %arg0, %c0_i32 : i32
    %40 = arith.extui %39 : i1 to i32
    %c0_i32_23 = arith.constant 0 : i32
    %41 = arith.cmpi ne, %40, %c0_i32_23 : i32
    scf.if %41 {
      %cst_40 = arith.constant 0.000000e+00 : f32
      %52 = vector.broadcast %cst_40 : f32 to vector<8x256xf32>
      %c0_41 = arith.constant 0 : index
      %c0_42 = arith.constant 0 : index
      %53 = vector.load %arg6[%c0_41, %c0_42] : memref<8x256xf32, #tpu.memory_space<vmem>>, vector<8x256xf32>
      tpu.vector_store %arg6[%c0_41, %c0_42], %52 {strides = array<i32>} : memref<8x256xf32, #tpu.memory_space<vmem>>, vector<8x256xf32>,
      %cst_43 = arith.constant 0.000000e+00 : f32
      %54 = vector.broadcast %cst_43 : f32 to vector<8x256xf32>
      %c0_44 = arith.constant 0 : index
      %c0_45 = arith.constant 0 : index
      %55 = vector.load %arg7[%c0_44, %c0_45] : memref<8x256xf32, #tpu.memory_space<vmem>>, vector<8x256xf32>
      tpu.vector_store %arg7[%c0_44, %c0_45], %54 {strides = array<i32>} : memref<8x256xf32, #tpu.memory_space<vmem>>, vector<8x256xf32>,
    } else {
    }
    %c0_24 = arith.constant 0 : index
    %c0_25 = arith.constant 0 : index
    %42 = vector.load %arg6[%c0_24, %c0_25] : memref<8x256xf32, #tpu.memory_space<vmem>>, vector<8x256xf32>
    %43 = arith.addf %42, %35 : vector<8x256xf32>
    %c0_26 = arith.constant 0 : index
    %c0_27 = arith.constant 0 : index
    %44 = vector.load %arg6[%c0_26, %c0_27] : memref<8x256xf32, #tpu.memory_space<vmem>>, vector<8x256xf32>
    tpu.vector_store %arg6[%c0_26, %c0_27], %43 {strides = array<i32>} : memref<8x256xf32, #tpu.memory_space<vmem>>, vector<8x256xf32>,
    %c0_28 = arith.constant 0 : index
    %c0_29 = arith.constant 0 : index
    %45 = vector.load %arg7[%c0_28, %c0_29] : memref<8x256xf32, #tpu.memory_space<vmem>>, vector<8x256xf32>
    %46 = arith.addf %45, %38 : vector<8x256xf32>
    %c0_30 = arith.constant 0 : index
    %c0_31 = arith.constant 0 : index
    %47 = vector.load %arg7[%c0_30, %c0_31] : memref<8x256xf32, #tpu.memory_space<vmem>>, vector<8x256xf32>
    tpu.vector_store %arg7[%c0_30, %c0_31], %46 {strides = array<i32>} : memref<8x256xf32, #tpu.memory_space<vmem>>, vector<8x256xf32>,
    %c0_32 = arith.constant 0 : index
    %c0_33 = arith.constant 0 : index
    %48 = vector.load %arg6[%c0_32, %c0_33] : memref<8x256xf32, #tpu.memory_space<vmem>>, vector<8x256xf32>
    %c0_34 = arith.constant 0 : index
    %c0_35 = arith.constant 0 : index
    %49 = vector.load %arg4[%c0_34, %c0_35] : memref<8x256xf32, #tpu.memory_space<vmem>>, vector<8x256xf32>
    tpu.vector_store %arg4[%c0_34, %c0_35], %48 {strides = array<i32>} : memref<8x256xf32, #tpu.memory_space<vmem>>, vector<8x256xf32>,
    %c0_36 = arith.constant 0 : index
    %c0_37 = arith.constant 0 : index
    %50 = vector.load %arg7[%c0_36, %c0_37] : memref<8x256xf32, #tpu.memory_space<vmem>>, vector<8x256xf32>
    %c0_38 = arith.constant 0 : index
    %c0_39 = arith.constant 0 : index
    %51 = vector.load %arg5[%c0_38, %c0_39] : memref<8x256xf32, #tpu.memory_space<vmem>>, vector<8x256xf32>
    tpu.vector_store %arg5[%c0_38, %c0_39], %50 {strides = array<i32>} : memref<8x256xf32, #tpu.memory_space<vmem>>, vector<8x256xf32>,
    return
  }
  func.func @transform_0(%arg0: i32) -> (i32, i32, i32) {
    %c0_i32 = arith.constant 0 : i32
    %c0_i32_0 = arith.constant 0 : i32
    %c0_i32_1 = arith.constant 0 : i32
    return %arg0, %c0_i32, %c0_i32_0 : i32, i32, i32
  }
  func.func @transform_1(%arg0: i32) -> (i32, i32, i32) {
    %c0_i32 = arith.constant 0 : i32
    %c0_i32_0 = arith.constant 0 : i32
    %c0_i32_1 = arith.constant 0 : i32
    %c0_i32_2 = arith.constant 0 : i32
    return %c0_i32, %c0_i32_0, %c0_i32_1 : i32, i32, i32
  }
  func.func @transform_2(%arg0: i32) -> (i32, i32, i32) {
    %c0_i32 = arith.constant 0 : i32
    %c0_i32_0 = arith.constant 0 : i32
    %c0_i32_1 = arith.constant 0 : i32
    return %arg0, %c0_i32, %c0_i32_0 : i32, i32, i32
  }
  func.func @transform_3(%arg0: i32) -> (i32, i32) {
    %c0_i32 = arith.constant 0 : i32
    %c0_i32_0 = arith.constant 0 : i32
    %c0_i32_1 = arith.constant 0 : i32
    return %c0_i32, %c0_i32_0 : i32, i32
  }
  func.func @transform_4(%arg0: i32) -> (i32, i32) {
    %c0_i32 = arith.constant 0 : i32
    %c0_i32_0 = arith.constant 0 : i32
    %c0_i32_1 = arith.constant 0 : i32
    return %c0_i32, %c0_i32_0 : i32, i32
  }
}

</mosaic_0001>

<llo_original>
// kernel: tpu_custom_call.1
$region0: #{tpu_custom_call.1}
  #allocation0 [shape = 'u32[]', space=smem, size = 0x4, offset = 0x4, fixed_abs, tag = 'smem constant byte address 0x4 - core index']
  #allocation1 [shape = 'u32[144,128]{1,0:T(1,128)}', space=vmem, size = 0x12000, scoped, tag = 'internal scratch']
  #allocation2 [shape = 'f32[8,256]{1,0:T(8,128)}', space=vmem, size = 0x2000, scoped, tag = 'scratch operand']
  #allocation3 [shape = 'f32[8,256]{1,0:T(8,128)}', space=vmem, size = 0x2000, scoped, tag = 'scratch operand']
  %s0 = inlined_call_operand.vmem [shape: bf16[2,20,80], index: 0, kind: input, shape index: {}]
  %s1 = inlined_call_operand.hbm [shape: bf16[5,80,256], index: 1, kind: input, shape index: {}]
  %s2 = inlined_call_operand.hbm [shape: f32[2,16,256], index: 2, kind: output, shape index: {0}]
  %s3 = inlined_call_operand.hbm [shape: f32[8,256], index: 3, kind: output, shape index: {1}]
  %s4 = inlined_call_operand.hbm [shape: f32[8,256], index: 4, kind: output, shape index: {2}]
  %5 = xla_tuple %s2, %s3, %s4
  %s6 = sld [smem:[#allocation0]]
  $region42: #{tpu_custom_call.1} parent=0
    _
  %s8 = ssub.s32 1, %s6
  %s9 = scalar_select 0, %s8, %s6
  $region1: #{tpu_custom_call.1} parent=0
    #allocation4 [shape = 'u8[204800]{0}', space=vmem, size = 0x32000, scoped, tag = 'input window, operand 1, single buffered']
    #allocation5 [shape = 's32[1]{0}', space=sflag, size = 0x4, scoped, tag = 'scoped memory for tpu_custom_call.1']
    #allocation6 [shape = 's32[1]{0}', space=sflag, size = 0x4, scoped, tag = 'scoped memory for tpu_custom_call.1']
    #allocation7 [shape = 'u8[32768]{0}', space=vmem, size = 0x8000, scoped, tag = 'output window, operand 0, single buffered']
    #allocation8 [shape = 'u8[8192]{0}', space=vmem, size = 0x2000, scoped, tag = 'output window, operand 1, single buffered']
    #allocation9 [shape = 's32[1]{0}', space=sflag, size = 0x4, scoped, tag = 'scoped memory for tpu_custom_call.1']
    #allocation10 [shape = 'u8[8192]{0}', space=vmem, size = 0x2000, scoped, tag = 'output window, operand 2, single buffered']
    %10 = vsyncpa [#allocation5], 0
    %11 = vsyncpa [#allocation6], 0
    %12 = vsyncpa [#allocation9], 0
    // Predicated region
    $region2: #{tpu_custom_call.1} parent=1 // pred_check
      _
    $region3: #{tpu_custom_call.1} parent=1 // pred_check_branch
      %14 = sbr.rel (0) target = $region5
    $region4: #{tpu_custom_call.1} parent=1 // pred_region
      _
    $region5: #{tpu_custom_call.1} parent=1 // pred_fallthru
      _
    // Predicated region
    $region6: #{tpu_custom_call.1} parent=1 // pred_check
      _
    $region7: #{tpu_custom_call.1} parent=1 // pred_check_branch
      %16 = sbr.rel (0) target = $region9
    $region8: #{tpu_custom_call.1} parent=1 // pred_region
      %s18 = ssub.s32 6400, 6400
      %19 = vsyncadd [#allocation5], %s18
      %s20 = sshll.u32 [#allocation4], 4
      %s21 = int_to_ptr.vmem [resolvable:$true] %s20
      %26 = dma.hbm_to_vmem [thread:$0]  %s1, 6400, %s21, [#allocation5], 128, 128, 8
    $region9: #{tpu_custom_call.1} parent=1 // pred_fallthru
      _
    // Predicated region
    $region10: #{tpu_custom_call.1} parent=1 // pred_check
      _
    $region11: #{tpu_custom_call.1} parent=1 // pred_check_branch
      %28 = sbr.rel (0) target = $region13
    $region12: #{tpu_custom_call.1} parent=1 // pred_region
      %29 = dma.done [#allocation5], 6400
    $region13: #{tpu_custom_call.1} parent=1 // pred_fallthru
      _
    %v31 = vld [vmem:[%s0] sm:$0xf]
    %v32 = vld [vmem:[%s0 + $0x4] sm:$0xf]
    %v33 = vld [vmem:[%s0 + $0x8] sm:$0x3]
    %v34 = vld [vmem:[%s0 + $0xc] sm:$0xf]
    %v35 = vld [vmem:[%s0 + $0x10] sm:$0xf]
    %v36 = vld [vmem:[%s0 + $0x14] sm:$0x3]
    %v37 = vld [vmem:[#allocation4] sm:$0xff]
    %v38 = vld [vmem:[#allocation4 + $0x8] sm:$0xff]
    %v39 = vld [vmem:[#allocation4 + $0x10] sm:$0xff]
    %v40 = vld [vmem:[#allocation4 + $0x18] sm:$0xff]
    %v41 = vld [vmem:[#allocation4 + $0x20] sm:$0xff]
    %v42 = vld [vmem:[#allocation4 + $0x28] sm:$0xff]
    %v43 = vld [vmem:[#allocation4 + $0x30] sm:$0xff]
    %v44 = vld [vmem:[#allocation4 + $0x38] sm:$0xff]
    %v45 = vld [vmem:[#allocation4 + $0x40] sm:$0xff]
    %v46 = vld [vmem:[#allocation4 + $0x48] sm:$0xff]
    %vm47 = vsmask.f32 3328
    %vm48 = vsmask.f32 7440
    %vm49 = vmor %vm47, %vm48
    %v51 = vshrl.u32 %v31, 16
    %v53 = vrot.slane %v51, 4
    %v54 = vshll.u32 %v31, 16
    %v56 = vrot.slane %v54, 5
    %v57 = vor.u32 %v53, %v56
    %v58 = vrot.slane %v57, 4
    %v60 = vshll.u32 %v32, 16
    %v62 = vrot.slane %v60, 5
    %v63 = vsel %vm49, %v58, %v62
    %v64 = vshrl.u32 %v32, 16
    %v66 = vrot.slane %v64, 4
    %v67 = vor.u32 %v66, %v62
    %v68 = vrot.slane %v67, 4
    %v70 = vshll.u32 %v33, 16
    %v72 = vrot.slane %v70, 5
    %v73 = vsel %vm49, %v68, %v72
    %v75 = vshrl.u32 %v34, 16
    %v77 = vrot.slane %v75, 4
    %v78 = vshll.u32 %v34, 16
    %v80 = vrot.slane %v78, 5
    %v81 = vor.u32 %v77, %v80
    %v82 = vrot.slane %v81, 4
    %v84 = vshll.u32 %v35, 16
    %v86 = vrot.slane %v84, 5
    %v87 = vsel %vm49, %v82, %v86
    %v88 = vshrl.u32 %v35, 16
    %v90 = vrot.slane %v88, 4
    %v91 = vor.u32 %v90, %v86
    %v92 = vrot.slane %v91, 4
    %v94 = vshll.u32 %v36, 16
    %v96 = vrot.slane %v94, 5
    %v97 = vsel %vm49, %v92, %v96
    %s98 = scalar_lea.vmem [#allocation4], 80
    %v99 = vld [vmem:[%s98] sm:$0xff]
    %v100 = vld [vmem:[%s98 + $0x8] sm:$0xff]
    %v101 = vld [vmem:[%s98 + $0x10] sm:$0xff]
    %v102 = vld [vmem:[%s98 + $0x18] sm:$0xff]
    %v103 = vld [vmem:[%s98 + $0x20] sm:$0xff]
    %v104 = vld [vmem:[%s98 + $0x28] sm:$0xff]
    %v105 = vld [vmem:[%s98 + $0x30] sm:$0xff]
    %v106 = vld [vmem:[%s98 + $0x38] sm:$0xff]
    %v107 = vld [vmem:[%s98 + $0x40] sm:$0xff]
    %v108 = vld [vmem:[%s98 + $0x48] sm:$0xff]
    %v109 = vunpack.c.l.b16 %v63
    %v110 = vunpack.c.l.b16 %v73
    %v111 = vunpack.c.l.b16 %v87
    %v112 = vunpack.c.l.b16 %v97
    %v113 = vpack.c.b16 %v110, %v109
    %v114 = vpack.c.b16 %v112, %v111
    %v125 = vunpack.c.l.b16 %v99
    %v126 = vunpack.c.h.b16 %v99
    %v127 = vunpack.c.l.b16 %v100
    %v128 = vunpack.c.h.b16 %v100
    %v129 = vunpack.c.l.b16 %v101
    %v130 = vunpack.c.h.b16 %v101
    %v131 = vunpack.c.l.b16 %v102
    %v132 = vunpack.c.h.b16 %v102
    %v133 = vunpack.c.l.b16 %v103
    %v134 = vunpack.c.h.b16 %v103
    %v135 = vunpack.c.l.b16 %v104
    %v136 = vunpack.c.h.b16 %v104
    %v137 = vunpack.c.l.b16 %v105
    %v138 = vunpack.c.h.b16 %v105
    %v139 = vunpack.c.l.b16 %v106
    %v140 = vunpack.c.h.b16 %v106
    %v141 = vunpack.c.l.b16 %v107
    %v142 = vunpack.c.h.b16 %v107
    %v143 = vunpack.c.l.b16 %v108
    %v144 = vunpack.c.h.b16 %v108
    %v145 = vpack.c.b16 %v127, %v125
    %v146 = vpack.c.b16 %v128, %v126
    %v147 = vpack.c.b16 %v131, %v129
    %v148 = vpack.c.b16 %v132, %v130
    %v149 = vpack.c.b16 %v135, %v133
    %v150 = vpack.c.b16 %v136, %v134
    %v151 = vpack.c.b16 %v139, %v137
    %v152 = vpack.c.b16 %v140, %v138
    %v153 = vpack.c.b16 %v143, %v141
    %v154 = vpack.c.b16 %v144, %v142
    %vm165 = vcmask 654336
    %v167 = vsel %vm165, %v113, 0
    %v170 = vsel %vm165, %v114, 0
    %172 = vmatprep.subr.bf16.mxu0 %v146
    %173 = vmatpush1.bf16.msra.mxu0 %v145
    %174 = vmatprep.subr.bf16.mxu0 %v148
    %175 = vmatpush1.bf16.msra.mxu0 %v147
    %176 = vmatprep.subr.bf16.mxu0 %v150
    %177 = vmatpush1.bf16.msra.mxu0 %v149
    %178 = vmatprep.subr.bf16.mxu0 %v152
    %179 = vmatpush1.bf16.msra.mxu0 %v151
    %180 = vmatprep.subr.bf16.mxu0 %v154
    %181 = vmatpush1.bf16.msra.mxu0 %v153
    %182 = vmatprep.subr.bf16.mxu0 0
    %183 = vmatpush1.bf16.msra.mxu0 0
    %184 = vmatprep.subr.bf16.mxu0 0
    %185 = vmatpush1.bf16.msra.mxu0 0
    %186 = vmatprep.subr.bf16.mxu0 0
    %187 = vmatpush1.bf16.msra.mxu0 0
    %188 = vmatprep.subr.bf16.mxu0 0
    %189 = vmatpush1.bf16.msra.mxu0 0
    %190 = vmatprep.subr.bf16.mxu0 0
    %191 = vmatpush1.bf16.msra.mxu0 0
    %192 = vmatprep.subr.bf16.mxu0 0
    %193 = vmatpush1.bf16.msra.mxu0 0
    %194 = vmatprep.subr.bf16.mxu0 0
    %195 = vmatpush1.bf16.msra.mxu0 0
    %196 = vmatprep.subr.bf16.mxu0 0
    %197 = vmatpush1.bf16.msra.mxu0 0
    %198 = vmatprep.subr.bf16.mxu0 0
    %199 = vmatpush1.bf16.msra.mxu0 0
    %200 = vmatprep.subr.bf16.mxu0 0
    %201 = vmatpush1.bf16.msra.mxu0 0
    %202 = vmatprep.subr.bf16.mxu0 0
    %203 = vmatpush1.bf16.msra.mxu0 0
    %204 = vmatprep.mubr.bf16.mxu0 0
    %205 = vmatmul.mubr.bf16.gmra.mrb[0].mxu0 %v167
    %v206 = vpop.f32.mrb[0].mxu0
    %v207 = vadd.f32 0.0, %v206
    %v208 = vpop.f32.mrb[0].mxu0
    %v209 = vadd.f32 0.0, %v208
    %v210 = vpop.f32.mrb[0].mxu0
    %v211 = vadd.f32 0.0, %v210
    %v212 = vpop.f32.mrb[0].mxu0
    %v213 = vadd.f32 0.0, %v212
    %214 = vmatprep.mubr.bf16.mxu0 0
    %215 = vmatmul.mubr.bf16.gmra.mrb[0].mxu0 %v170
    %v216 = vpop.f32.mrb[0].mxu0
    %v217 = vadd.f32 0.0, %v216
    %v218 = vpop.f32.mrb[0].mxu0
    %v219 = vadd.f32 0.0, %v218
    %v220 = vpop.f32.mrb[0].mxu0
    %v221 = vadd.f32 0.0, %v220
    %v222 = vpop.f32.mrb[0].mxu0
    %v223 = vadd.f32 0.0, %v222
    %224 = vdwg.mxu0
    %v229 = vunpack.c.l.b16 %v31
    %v230 = vunpack.c.l.b16 %v32
    %v231 = vunpack.c.l.b16 %v34
    %v232 = vunpack.c.l.b16 %v35
    %v233 = vpack.c.b16 %v230, %v229
    %v234 = vpack.c.b16 %v232, %v231
    %v245 = vunpack.c.l.b16 %v37
    %v246 = vunpack.c.h.b16 %v37
    %v247 = vunpack.c.l.b16 %v38
    %v248 = vunpack.c.h.b16 %v38
    %v249 = vunpack.c.l.b16 %v39
    %v250 = vunpack.c.h.b16 %v39
    %v251 = vunpack.c.l.b16 %v40
    %v252 = vunpack.c.h.b16 %v40
    %v253 = vunpack.c.l.b16 %v41
    %v254 = vunpack.c.h.b16 %v41
    %v255 = vunpack.c.l.b16 %v42
    %v256 = vunpack.c.h.b16 %v42
    %v257 = vunpack.c.l.b16 %v43
    %v258 = vunpack.c.h.b16 %v43
    %v259 = vunpack.c.l.b16 %v44
    %v260 = vunpack.c.h.b16 %v44
    %v261 = vunpack.c.l.b16 %v45
    %v262 = vunpack.c.h.b16 %v45
    %v263 = vunpack.c.l.b16 %v46
    %v264 = vunpack.c.h.b16 %v46
    %v265 = vpack.c.b16 %v247, %v245
    %v266 = vpack.c.b16 %v248, %v246
    %v267 = vpack.c.b16 %v251, %v249
    %v268 = vpack.c.b16 %v252, %v250
    %v269 = vpack.c.b16 %v255, %v253
    %v270 = vpack.c.b16 %v256, %v254
    %v271 = vpack.c.b16 %v259, %v257
    %v272 = vpack.c.b16 %v260, %v258
    %v273 = vpack.c.b16 %v263, %v261
    %v274 = vpack.c.b16 %v264, %v262
    %v286 = vsel %vm165, %v233, 0
    %v289 = vsel %vm165, %v234, 0
    %291 = vmatprep.subr.bf16.mxu0 %v266
    %292 = vmatpush1.bf16.msra.mxu0 %v265
    %293 = vmatprep.subr.bf16.mxu0 %v268
    %294 = vmatpush1.bf16.msra.mxu0 %v267
    %295 = vmatprep.subr.bf16.mxu0 %v270
    %296 = vmatpush1.bf16.msra.mxu0 %v269
    %297 = vmatprep.subr.bf16.mxu0 %v272
    %298 = vmatpush1.bf16.msra.mxu0 %v271
    %299 = vmatprep.subr.bf16.mxu0 %v274
    %300 = vmatpush1.bf16.msra.mxu0 %v273
    %301 = vmatprep.subr.bf16.mxu0 0
    %302 = vmatpush1.bf16.msra.mxu0 0
    %303 = vmatprep.subr.bf16.mxu0 0
    %304 = vmatpush1.bf16.msra.mxu0 0
    %305 = vmatprep.subr.bf16.mxu0 0
    %306 = vmatpush1.bf16.msra.mxu0 0
    %307 = vmatprep.subr.bf16.mxu0 0
    %308 = vmatpush1.bf16.msra.mxu0 0
    %309 = vmatprep.subr.bf16.mxu0 0
    %310 = vmatpush1.bf16.msra.mxu0 0
    %311 = vmatprep.subr.bf16.mxu0 0
    %312 = vmatpush1.bf16.msra.mxu0 0
    %313 = vmatprep.subr.bf16.mxu0 0
    %314 = vmatpush1.bf16.msra.mxu0 0
    %315 = vmatprep.subr.bf16.mxu0 0
    %316 = vmatpush1.bf16.msra.mxu0 0
    %317 = vmatprep.subr.bf16.mxu0 0
    %318 = vmatpush1.bf16.msra.mxu0 0
    %319 = vmatprep.subr.bf16.mxu0 0
    %320 = vmatpush1.bf16.msra.mxu0 0
    %321 = vmatprep.subr.bf16.mxu0 0
    %322 = vmatpush1.bf16.msra.mxu0 0
    %323 = vmatprep.mubr.bf16.mxu0 0
    %324 = vmatmul.mubr.bf16.gmra.mrb[0].mxu0 %v286
    %v325 = vpop.f32.mrb[0].mxu0
    %v326 = vadd.f32 %v207, %v325
    %v327 = vpop.f32.mrb[0].mxu0
    %v328 = vadd.f32 %v209, %v327
    %v329 = vpop.f32.mrb[0].mxu0
    %v330 = vadd.f32 %v211, %v329
    %v331 = vpop.f32.mrb[0].mxu0
    %v332 = vadd.f32 %v213, %v331
    %333 = vmatprep.mubr.bf16.mxu0 0
    %334 = vmatmul.mubr.bf16.gmra.mrb[0].mxu0 %v289
    %v335 = vpop.f32.mrb[0].mxu0
    %v336 = vadd.f32 %v217, %v335
    %v337 = vpop.f32.mrb[0].mxu0
    %v338 = vadd.f32 %v219, %v337
    %v339 = vpop.f32.mrb[0].mxu0
    %v340 = vadd.f32 %v221, %v339
    %v341 = vpop.f32.mrb[0].mxu0
    %v342 = vadd.f32 %v223, %v341
    %343 = vdwg.mxu0
    %vm346 = vcmask 1042432
    %vm347 = vcmask 1046532
    %vm348 = vmor %vm346, %vm347
    %v349 = vrot.slane %v31, 5
    %v350 = vrot.slane %v349, 4
    %v351 = vrot.slane %v32, 5
    %v352 = vsel %vm348, %v350, %v351
    %v353 = vrot.slane %v351, 4
    %v354 = vrot.slane %v33, 5
    %v355 = vsel %vm348, %v353, %v354
    %v356 = vrot.slane %v34, 5
    %v357 = vrot.slane %v356, 4
    %v358 = vrot.slane %v35, 5
    %v359 = vsel %vm348, %v357, %v358
    %v360 = vrot.slane %v358, 4
    %v361 = vrot.slane %v36, 5
    %v362 = vsel %vm348, %v360, %v361
    %s363 = scalar_lea.vmem [#allocation4], 160
    %v364 = vld [vmem:[%s363] sm:$0xff]
    %v365 = vld [vmem:[%s363 + $0x8] sm:$0xff]
    %v366 = vld [vmem:[%s363 + $0x10] sm:$0xff]
    %v367 = vld [vmem:[%s363 + $0x18] sm:$0xff]
    %v368 = vld [vmem:[%s363 + $0x20] sm:$0xff]
    %v369 = vld [vmem:[%s363 + $0x28] sm:$0xff]
    %v370 = vld [vmem:[%s363 + $0x30] sm:$0xff]
    %v371 = vld [vmem:[%s363 + $0x38] sm:$0xff]
    %v372 = vld [vmem:[%s363 + $0x40] sm:$0xff]
    %v373 = vld [vmem:[%s363 + $0x48] sm:$0xff]
    %v374 = vunpack.c.l.b16 %v352
    %v375 = vunpack.c.l.b16 %v355
    %v376 = vunpack.c.l.b16 %v359
    %v377 = vunpack.c.l.b16 %v362
    %v378 = vpack.c.b16 %v375, %v374
    %v379 = vpack.c.b16 %v377, %v376
    %v390 = vunpack.c.l.b16 %v364
    %v391 = vunpack.c.h.b16 %v364
    %v392 = vunpack.c.l.b16 %v365
    %v393 = vunpack.c.h.b16 %v365
    %v394 = vunpack.c.l.b16 %v366
    %v395 = vunpack.c.h.b16 %v366
    %v396 = vunpack.c.l.b16 %v367
    %v397 = vunpack.c.h.b16 %v367
    %v398 = vunpack.c.l.b16 %v368
    %v399 = vunpack.c.h.b16 %v368
    %v400 = vunpack.c.l.b16 %v369
    %v401 = vunpack.c.h.b16 %v369
    %v402 = vunpack.c.l.b16 %v370
    %v403 = vunpack.c.h.b16 %v370
    %v404 = vunpack.c.l.b16 %v371
    %v405 = vunpack.c.h.b16 %v371
    %v406 = vunpack.c.l.b16 %v372
    %v407 = vunpack.c.h.b16 %v372
    %v408 = vunpack.c.l.b16 %v373
    %v409 = vunpack.c.h.b16 %v373
    %v410 = vpack.c.b16 %v392, %v390
    %v411 = vpack.c.b16 %v393, %v391
    %v412 = vpack.c.b16 %v396, %v394
    %v413 = vpack.c.b16 %v397, %v395
    %v414 = vpack.c.b16 %v400, %v398
    %v415 = vpack.c.b16 %v401, %v399
    %v416 = vpack.c.b16 %v404, %v402
    %v417 = vpack.c.b16 %v405, %v403
    %v418 = vpack.c.b16 %v408, %v406
    %v419 = vpack.c.b16 %v409, %v407
    %v431 = vsel %vm165, %v378, 0
    %v434 = vsel %vm165, %v379, 0
    %436 = vmatprep.subr.bf16.mxu0 %v411
    %437 = vmatpush1.bf16.msra.mxu0 %v410
    %438 = vmatprep.subr.bf16.mxu0 %v413
    %439 = vmatpush1.bf16.msra.mxu0 %v412
    %440 = vmatprep.subr.bf16.mxu0 %v415
    %441 = vmatpush1.bf16.msra.mxu0 %v414
    %442 = vmatprep.subr.bf16.mxu0 %v417
    %443 = vmatpush1.bf16.msra.mxu0 %v416
    %444 = vmatprep.subr.bf16.mxu0 %v419
    %445 = vmatpush1.bf16.msra.mxu0 %v418
    %446 = vmatprep.subr.bf16.mxu0 0
    %447 = vmatpush1.bf16.msra.mxu0 0
    %448 = vmatprep.subr.bf16.mxu0 0
    %449 = vmatpush1.bf16.msra.mxu0 0
    %450 = vmatprep.subr.bf16.mxu0 0
    %451 = vmatpush1.bf16.msra.mxu0 0
    %452 = vmatprep.subr.bf16.mxu0 0
    %453 = vmatpush1.bf16.msra.mxu0 0
    %454 = vmatprep.subr.bf16.mxu0 0
    %455 = vmatpush1.bf16.msra.mxu0 0
    %456 = vmatprep.subr.bf16.mxu0 0
    %457 = vmatpush1.bf16.msra.mxu0 0
    %458 = vmatprep.subr.bf16.mxu0 0
    %459 = vmatpush1.bf16.msra.mxu0 0
    %460 = vmatprep.subr.bf16.mxu0 0
    %461 = vmatpush1.bf16.msra.mxu0 0
    %462 = vmatprep.subr.bf16.mxu0 0
    %463 = vmatpush1.bf16.msra.mxu0 0
    %464 = vmatprep.subr.bf16.mxu0 0
    %465 = vmatpush1.bf16.msra.mxu0 0
    %466 = vmatprep.subr.bf16.mxu0 0
    %467 = vmatpush1.bf16.msra.mxu0 0
    %468 = vmatprep.mubr.bf16.mxu0 0
    %469 = vmatmul.mubr.bf16.gmra.mrb[0].mxu0 %v431
    %v470 = vpop.f32.mrb[0].mxu0
    %v471 = vadd.f32 0.0, %v470
    %v472 = vpop.f32.mrb[0].mxu0
    %v473 = vadd.f32 0.0, %v472
    %v474 = vpop.f32.mrb[0].mxu0
    %v475 = vadd.f32 0.0, %v474
    %v476 = vpop.f32.mrb[0].mxu0
    %v477 = vadd.f32 0.0, %v476
    %478 = vmatprep.mubr.bf16.mxu0 0
    %479 = vmatmul.mubr.bf16.gmra.mrb[0].mxu0 %v434
    %v480 = vpop.f32.mrb[0].mxu0
    %v481 = vadd.f32 0.0, %v480
    %v482 = vpop.f32.mrb[0].mxu0
    %v483 = vadd.f32 0.0, %v482
    %v484 = vpop.f32.mrb[0].mxu0
    %v485 = vadd.f32 0.0, %v484
    %v486 = vpop.f32.mrb[0].mxu0
    %v487 = vadd.f32 0.0, %v486
    %488 = vdwg.mxu0
    %v489 = vadd.f32 %v326, %v471
    %v490 = vadd.f32 %v328, %v473
    %v491 = vadd.f32 %v330, %v475
    %v492 = vadd.f32 %v332, %v477
    %v493 = vadd.f32 %v336, %v481
    %v494 = vadd.f32 %v338, %v483
    %v495 = vadd.f32 %v340, %v485
    %v496 = vadd.f32 %v342, %v487
    %vm497 = vsmask.f32 2304
    %vm498 = vsmask.f32 6416
    %vm499 = vmor %vm497, %vm498
    %v500 = vrot.slane %v51, 5
    %v501 = vrot.slane %v54, 6
    %v502 = vor.u32 %v500, %v501
    %v503 = vrot.slane %v502, 4
    %v504 = vrot.slane %v64, 5
    %v505 = vrot.slane %v60, 6
    %v506 = vor.u32 %v504, %v505
    %v507 = vsel %vm499, %v503, %v506
    %v508 = vrot.slane %v506, 4
    %v509 = vshrl.u32 %v33, 16
    %v511 = vrot.slane %v509, 5
    %v512 = vrot.slane %v70, 6
    %v513 = vor.u32 %v511, %v512
    %v514 = vsel %vm499, %v508, %v513
    %v515 = vrot.slane %v75, 5
    %v516 = vrot.slane %v78, 6
    %v517 = vor.u32 %v515, %v516
    %v518 = vrot.slane %v517, 4
    %v519 = vrot.slane %v88, 5
    %v520 = vrot.slane %v84, 6
    %v521 = vor.u32 %v519, %v520
    %v522 = vsel %vm499, %v518, %v521
    %v523 = vrot.slane %v521, 4
    %v524 = vshrl.u32 %v36, 16
    %v526 = vrot.slane %v524, 5
    %v527 = vrot.slane %v94, 6
    %v528 = vor.u32 %v526, %v527
    %v529 = vsel %vm499, %v523, %v528
    %s530 = scalar_lea.vmem [#allocation4], 240
    %v531 = vld [vmem:[%s530] sm:$0xff]
    %v532 = vld [vmem:[%s530 + $0x8] sm:$0xff]
    %v533 = vld [vmem:[%s530 + $0x10] sm:$0xff]
    %v534 = vld [vmem:[%s530 + $0x18] sm:$0xff]
    %v535 = vld [vmem:[%s530 + $0x20] sm:$0xff]
    %v536 = vld [vmem:[%s530 + $0x28] sm:$0xff]
    %v537 = vld [vmem:[%s530 + $0x30] sm:$0xff]
    %v538 = vld [vmem:[%s530 + $0x38] sm:$0xff]
    %v539 = vld [vmem:[%s530 + $0x40] sm:$0xff]
    %v540 = vld [vmem:[%s530 + $0x48] sm:$0xff]
    %v541 = vunpack.c.l.b16 %v507
    %v542 = vunpack.c.l.b16 %v514
    %v543 = vunpack.c.l.b16 %v522
    %v544 = vunpack.c.l.b16 %v529
    %v545 = vpack.c.b16 %v542, %v541
    %v546 = vpack.c.b16 %v544, %v543
    %v557 = vunpack.c.l.b16 %v531
    %v558 = vunpack.c.h.b16 %v531
    %v559 = vunpack.c.l.b16 %v532
    %v560 = vunpack.c.h.b16 %v532
    %v561 = vunpack.c.l.b16 %v533
    %v562 = vunpack.c.h.b16 %v533
    %v563 = vunpack.c.l.b16 %v534
    %v564 = vunpack.c.h.b16 %v534
    %v565 = vunpack.c.l.b16 %v535
    %v566 = vunpack.c.h.b16 %v535
    %v567 = vunpack.c.l.b16 %v536
    %v568 = vunpack.c.h.b16 %v536
    %v569 = vunpack.c.l.b16 %v537
    %v570 = vunpack.c.h.b16 %v537
    %v571 = vunpack.c.l.b16 %v538
    %v572 = vunpack.c.h.b16 %v538
    %v573 = vunpack.c.l.b16 %v539
    %v574 = vunpack.c.h.b16 %v539
    %v575 = vunpack.c.l.b16 %v540
    %v576 = vunpack.c.h.b16 %v540
    %v577 = vpack.c.b16 %v559, %v557
    %v578 = vpack.c.b16 %v560, %v558
    %v579 = vpack.c.b16 %v563, %v561
    %v580 = vpack.c.b16 %v564, %v562
    %v581 = vpack.c.b16 %v567, %v565
    %v582 = vpack.c.b16 %v568, %v566
    %v583 = vpack.c.b16 %v571, %v569
    %v584 = vpack.c.b16 %v572, %v570
    %v585 = vpack.c.b16 %v575, %v573
    %v586 = vpack.c.b16 %v576, %v574
    %v598 = vsel %vm165, %v545, 0
    %v601 = vsel %vm165, %v546, 0
    %603 = vmatprep.subr.bf16.mxu0 %v578
    %604 = vmatpush1.bf16.msra.mxu0 %v577
    %605 = vmatprep.subr.bf16.mxu0 %v580
    %606 = vmatpush1.bf16.msra.mxu0 %v579
    %607 = vmatprep.subr.bf16.mxu0 %v582
    %608 = vmatpush1.bf16.msra.mxu0 %v581
    %609 = vmatprep.subr.bf16.mxu0 %v584
    %610 = vmatpush1.bf16.msra.mxu0 %v583
    %611 = vmatprep.subr.bf16.mxu0 %v586
    %612 = vmatpush1.bf16.msra.mxu0 %v585
    %613 = vmatprep.subr.bf16.mxu0 0
    %614 = vmatpush1.bf16.msra.mxu0 0
    %615 = vmatprep.subr.bf16.mxu0 0
    %616 = vmatpush1.bf16.msra.mxu0 0
    %617 = vmatprep.subr.bf16.mxu0 0
    %618 = vmatpush1.bf16.msra.mxu0 0
    %619 = vmatprep.subr.bf16.mxu0 0
    %620 = vmatpush1.bf16.msra.mxu0 0
    %621 = vmatprep.subr.bf16.mxu0 0
    %622 = vmatpush1.bf16.msra.mxu0 0
    %623 = vmatprep.subr.bf16.mxu0 0
    %624 = vmatpush1.bf16.msra.mxu0 0
    %625 = vmatprep.subr.bf16.mxu0 0
    %626 = vmatpush1.bf16.msra.mxu0 0
    %627 = vmatprep.subr.bf16.mxu0 0
    %628 = vmatpush1.bf16.msra.mxu0 0
    %629 = vmatprep.subr.bf16.mxu0 0
    %630 = vmatpush1.bf16.msra.mxu0 0
    %631 = vmatprep.subr.bf16.mxu0 0
    %632 = vmatpush1.bf16.msra.mxu0 0
    %633 = vmatprep.subr.bf16.mxu0 0
    %634 = vmatpush1.bf16.msra.mxu0 0
    %635 = vmatprep.mubr.bf16.mxu0 0
    %636 = vmatmul.mubr.bf16.gmra.mrb[0].mxu0 %v598
    %v637 = vpop.f32.mrb[0].mxu0
    %v638 = vadd.f32 0.0, %v637
    %v639 = vpop.f32.mrb[0].mxu0
    %v640 = vadd.f32 0.0, %v639
    %v641 = vpop.f32.mrb[0].mxu0
    %v642 = vadd.f32 0.0, %v641
    %v643 = vpop.f32.mrb[0].mxu0
    %v644 = vadd.f32 0.0, %v643
    %645 = vmatprep.mubr.bf16.mxu0 0
    %646 = vmatmul.mubr.bf16.gmra.mrb[0].mxu0 %v601
    %v647 = vpop.f32.mrb[0].mxu0
    %v648 = vadd.f32 0.0, %v647
    %v649 = vpop.f32.mrb[0].mxu0
    %v650 = vadd.f32 0.0, %v649
    %v651 = vpop.f32.mrb[0].mxu0
    %v652 = vadd.f32 0.0, %v651
    %v653 = vpop.f32.mrb[0].mxu0
    %v654 = vadd.f32 0.0, %v653
    %655 = vdwg.mxu0
    %v656 = vadd.f32 %v489, %v638
    %v657 = vadd.f32 %v490, %v640
    %v658 = vadd.f32 %v491, %v642
    %v659 = vadd.f32 %v492, %v644
    %v660 = vadd.f32 %v493, %v648
    %v661 = vadd.f32 %v494, %v650
    %v662 = vadd.f32 %v495, %v652
    %v663 = vadd.f32 %v496, %v654
    %vm664 = vcmask 1041408
    %vm665 = vcmask 1045508
    %vm666 = vmor %vm664, %vm665
    %v667 = vrot.slane %v31, 6
    %v668 = vrot.slane %v667, 4
    %v669 = vrot.slane %v32, 6
    %v670 = vsel %vm666, %v668, %v669
    %v671 = vrot.slane %v669, 4
    %v672 = vrot.slane %v33, 6
    %v673 = vsel %vm666, %v671, %v672
    %v674 = vrot.slane %v34, 6
    %v675 = vrot.slane %v674, 4
    %v676 = vrot.slane %v35, 6
    %v677 = vsel %vm666, %v675, %v676
    %v678 = vrot.slane %v676, 4
    %v679 = vrot.slane %v36, 6
    %v680 = vsel %vm666, %v678, %v679
    %s681 = scalar_lea.vmem [#allocation4], 320
    %v682 = vld [vmem:[%s681] sm:$0xff]
    %v683 = vld [vmem:[%s681 + $0x8] sm:$0xff]
    %v684 = vld [vmem:[%s681 + $0x10] sm:$0xff]
    %v685 = vld [vmem:[%s681 + $0x18] sm:$0xff]
    %v686 = vld [vmem:[%s681 + $0x20] sm:$0xff]
    %v687 = vld [vmem:[%s681 + $0x28] sm:$0xff]
    %v688 = vld [vmem:[%s681 + $0x30] sm:$0xff]
    %v689 = vld [vmem:[%s681 + $0x38] sm:$0xff]
    %v690 = vld [vmem:[%s681 + $0x40] sm:$0xff]
    %v691 = vld [vmem:[%s681 + $0x48] sm:$0xff]
    %v692 = vunpack.c.l.b16 %v670
    %v693 = vunpack.c.l.b16 %v673
    %v694 = vunpack.c.l.b16 %v677
    %v695 = vunpack.c.l.b16 %v680
    %v696 = vpack.c.b16 %v693, %v692
    %v697 = vpack.c.b16 %v695, %v694
    %v708 = vunpack.c.l.b16 %v682
    %v709 = vunpack.c.h.b16 %v682
    %v710 = vunpack.c.l.b16 %v683
    %v711 = vunpack.c.h.b16 %v683
    %v712 = vunpack.c.l.b16 %v684
    %v713 = vunpack.c.h.b16 %v684
    %v714 = vunpack.c.l.b16 %v685
    %v715 = vunpack.c.h.b16 %v685
    %v716 = vunpack.c.l.b16 %v686
    %v717 = vunpack.c.h.b16 %v686
    %v718 = vunpack.c.l.b16 %v687
    %v719 = vunpack.c.h.b16 %v687
    %v720 = vunpack.c.l.b16 %v688
    %v721 = vunpack.c.h.b16 %v688
    %v722 = vunpack.c.l.b16 %v689
    %v723 = vunpack.c.h.b16 %v689
    %v724 = vunpack.c.l.b16 %v690
    %v725 = vunpack.c.h.b16 %v690
    %v726 = vunpack.c.l.b16 %v691
    %v727 = vunpack.c.h.b16 %v691
    %v728 = vpack.c.b16 %v710, %v708
    %v729 = vpack.c.b16 %v711, %v709
    %v730 = vpack.c.b16 %v714, %v712
    %v731 = vpack.c.b16 %v715, %v713
    %v732 = vpack.c.b16 %v718, %v716
    %v733 = vpack.c.b16 %v719, %v717
    %v734 = vpack.c.b16 %v722, %v720
    %v735 = vpack.c.b16 %v723, %v721
    %v736 = vpack.c.b16 %v726, %v724
    %v737 = vpack.c.b16 %v727, %v725
    %v749 = vsel %vm165, %v696, 0
    %v752 = vsel %vm165, %v697, 0
    %754 = vmatprep.subr.bf16.mxu0 %v729
    %755 = vmatpush1.bf16.msra.mxu0 %v728
    %756 = vmatprep.subr.bf16.mxu0 %v731
    %757 = vmatpush1.bf16.msra.mxu0 %v730
    %758 = vmatprep.subr.bf16.mxu0 %v733
    %759 = vmatpush1.bf16.msra.mxu0 %v732
    %760 = vmatprep.subr.bf16.mxu0 %v735
    %761 = vmatpush1.bf16.msra.mxu0 %v734
    %762 = vmatprep.subr.bf16.mxu0 %v737
    %763 = vmatpush1.bf16.msra.mxu0 %v736
    %764 = vmatprep.subr.bf16.mxu0 0
    %765 = vmatpush1.bf16.msra.mxu0 0
    %766 = vmatprep.subr.bf16.mxu0 0
    %767 = vmatpush1.bf16.msra.mxu0 0
    %768 = vmatprep.subr.bf16.mxu0 0
    %769 = vmatpush1.bf16.msra.mxu0 0
    %770 = vmatprep.subr.bf16.mxu0 0
    %771 = vmatpush1.bf16.msra.mxu0 0
    %772 = vmatprep.subr.bf16.mxu0 0
    %773 = vmatpush1.bf16.msra.mxu0 0
    %774 = vmatprep.subr.bf16.mxu0 0
    %775 = vmatpush1.bf16.msra.mxu0 0
    %776 = vmatprep.subr.bf16.mxu0 0
    %777 = vmatpush1.bf16.msra.mxu0 0
    %778 = vmatprep.subr.bf16.mxu0 0
    %779 = vmatpush1.bf16.msra.mxu0 0
    %780 = vmatprep.subr.bf16.mxu0 0
    %781 = vmatpush1.bf16.msra.mxu0 0
    %782 = vmatprep.subr.bf16.mxu0 0
    %783 = vmatpush1.bf16.msra.mxu0 0
    %784 = vmatprep.subr.bf16.mxu0 0
    %785 = vmatpush1.bf16.msra.mxu0 0
    %786 = vmatprep.mubr.bf16.mxu0 0
    %787 = vmatmul.mubr.bf16.gmra.mrb[0].mxu0 %v749
    %v788 = vpop.f32.mrb[0].mxu0
    %v789 = vadd.f32 0.0, %v788
    %v790 = vpop.f32.mrb[0].mxu0
    %v791 = vadd.f32 0.0, %v790
    %v792 = vpop.f32.mrb[0].mxu0
    %v793 = vadd.f32 0.0, %v792
    %v794 = vpop.f32.mrb[0].mxu0
    %v795 = vadd.f32 0.0, %v794
    %796 = vmatprep.mubr.bf16.mxu0 0
    %797 = vmatmul.mubr.bf16.gmra.mrb[0].mxu0 %v752
    %v798 = vpop.f32.mrb[0].mxu0
    %v799 = vadd.f32 0.0, %v798
    %v800 = vpop.f32.mrb[0].mxu0
    %v801 = vadd.f32 0.0, %v800
    %v802 = vpop.f32.mrb[0].mxu0
    %v803 = vadd.f32 0.0, %v802
    %v804 = vpop.f32.mrb[0].mxu0
    %v805 = vadd.f32 0.0, %v804
    %806 = vdwg.mxu0
    %v807 = vadd.f32 %v656, %v789
    %v808 = vadd.f32 %v657, %v791
    %v809 = vadd.f32 %v658, %v793
    %v810 = vadd.f32 %v659, %v795
    %v811 = vadd.f32 %v660, %v799
    %v812 = vadd.f32 %v661, %v801
    %v813 = vadd.f32 %v662, %v803
    %v814 = vadd.f32 %v663, %v805
    %815 = vst [vmem:[#allocation7] sm:$0xff] %v807
    %816 = vst [vmem:[#allocation7 + $0x8] sm:$0xff] %v808
    %817 = vst [vmem:[#allocation7 + $0x10] sm:$0xff] %v809
    %818 = vst [vmem:[#allocation7 + $0x18] sm:$0xff] %v810
    %819 = vst [vmem:[#allocation7 + $0x20] sm:$0xff] %v811
    %820 = vst [vmem:[#allocation7 + $0x28] sm:$0xff] %v812
    %821 = vst [vmem:[#allocation7 + $0x30] sm:$0xff] %v813
    %822 = vst [vmem:[#allocation7 + $0x38] sm:$0xff] %v814
    %v823 = vadd.f32 %v807, %v809
    %v824 = vadd.f32 %v823, %v811
    %v825 = vadd.f32 %v824, %v813
    %v826 = vadd.f32 %v808, %v810
    %v827 = vadd.f32 %v826, %v812
    %v828 = vadd.f32 %v827, %v814
    %v829 = vmul.f32 %v807, %v807
    %v830 = vmul.f32 %v808, %v808
    %v831 = vmul.f32 %v809, %v809
    %v832 = vmul.f32 %v810, %v810
    %v833 = vmul.f32 %v811, %v811
    %v834 = vmul.f32 %v812, %v812
    %v835 = vmul.f32 %v813, %v813
    %v836 = vmul.f32 %v814, %v814
    %v837 = vadd.f32 %v829, %v831
    %v838 = vadd.f32 %v837, %v833
    %v839 = vadd.f32 %v838, %v835
    %v840 = vadd.f32 %v830, %v832
    %v841 = vadd.f32 %v840, %v834
    %v842 = vadd.f32 %v841, %v836
    %p843 = scmp.eq.s32.totalorder 0, 0
    // Predicated region
    $region14: #{tpu_custom_call.1} parent=1 // pred_check
      %p844 = pneg %p843
    $region15: #{tpu_custom_call.1} parent=1 // pred_check_branch
      %846 = sbr.rel (%p844) target = $region17
    $region16: #{tpu_custom_call.1} parent=1 // pred_region
      %847 = vst [vmem:[#allocation2] sm:$0xff] 0.0
      %848 = vst [vmem:[#allocation2 + $0x8] sm:$0xff] 0.0
      %849 = vst [vmem:[#allocation3] sm:$0xff] 0.0
      %850 = vst [vmem:[#allocation3 + $0x8] sm:$0xff] 0.0
    $region17: #{tpu_custom_call.1} parent=1 // pred_fallthru
      _
    %v851 = vld [vmem:[#allocation2] sm:$0xff]
    %v852 = vld [vmem:[#allocation2 + $0x8] sm:$0xff]
    %v853 = vadd.f32 %v851, %v825
    %v854 = vadd.f32 %v852, %v828
    %855 = vst [vmem:[#allocation2] sm:$0xff] %v853
    %856 = vst [vmem:[#allocation2 + $0x8] sm:$0xff] %v854
    %v857 = vld [vmem:[#allocation3] sm:$0xff]
    %v858 = vld [vmem:[#allocation3 + $0x8] sm:$0xff]
    %v859 = vadd.f32 %v857, %v839
    %v860 = vadd.f32 %v858, %v842
    %861 = vst [vmem:[#allocation3] sm:$0xff] %v859
    %862 = vst [vmem:[#allocation3 + $0x8] sm:$0xff] %v860
    %v863 = vld [vmem:[#allocation2] sm:$0xff]
    %v864 = vld [vmem:[#allocation2 + $0x8] sm:$0xff]
    %865 = vst [vmem:[#allocation8] sm:$0xff] %v863
    %866 = vst [vmem:[#allocation8 + $0x8] sm:$0xff] %v864
    %v867 = vld [vmem:[#allocation3] sm:$0xff]
    %v868 = vld [vmem:[#allocation3 + $0x8] sm:$0xff]
    %869 = vst [vmem:[#allocation10] sm:$0xff] %v867
    %870 = vst [vmem:[#allocation10 + $0x8] sm:$0xff] %v868
    // Predicated region
    $region18: #{tpu_custom_call.1} parent=1 // pred_check
      _
    $region19: #{tpu_custom_call.1} parent=1 // pred_check_branch
      %872 = sbr.rel (0) target = $region21
    $region20: #{tpu_custom_call.1} parent=1 // pred_region
      %s874 = ssub.s32 1024, 1024
      %875 = vsyncadd [#allocation6], %s874
      %s876 = sshll.u32 [#allocation7], 4
      %s877 = int_to_ptr.vmem [resolvable:$true] %s876
      %882 = dma.vmem_to_hbm [thread:$0]  %s877, 1024, %s2, [#allocation6], 256, 256, 16
    $region21: #{tpu_custom_call.1} parent=1 // pred_fallthru
      _
    // Predicated region
    $region22: #{tpu_custom_call.1} parent=1 // pred_check
      _
    $region23: #{tpu_custom_call.1} parent=1 // pred_check_branch
      %884 = sbr.rel (0) target = $region25
    $region24: #{tpu_custom_call.1} parent=1 // pred_region
      %s886 = ssub.s32 256, 256
      %887 = vsyncadd [#allocation9], %s886
      %s889 = sshll.u32 [#allocation8], 4
      %s890 = int_to_ptr.vmem [resolvable:$true] %s889
      %892 = dma.vmem_to_hbm [thread:$0]  %s890, 256, %s3, [#allocation9]
    $region25: #{tpu_custom_call.1} parent=1 // pred_fallthru
      _
    // Predicated region
    $region26: #{tpu_custom_call.1} parent=1 // pred_check
      _
    $region27: #{tpu_custom_call.1} parent=1 // pred_check_branch
      %894 = sbr.rel (0) target = $region29
    $region28: #{tpu_custom_call.1} parent=1 // pred_region
      %s896 = ssub.s32 256, 256
      %897 = vsyncadd [#allocation9], %s896
      %s899 = sshll.u32 [#allocation10], 4
      %s900 = int_to_ptr.vmem [resolvable:$true] %s899
      %902 = dma.vmem_to_hbm [thread:$0]  %s900, 256, %s4, [#allocation9]
    $region29: #{tpu_custom_call.1} parent=1 // pred_fallthru
      _
    // Predicated region
    $region30: #{tpu_custom_call.1} parent=1 // pred_check
      _
    $region31: #{tpu_custom_call.1} parent=1 // pred_check_branch
      %904 = sbr.rel (0) target = $region33
    $region32: #{tpu_custom_call.1} parent=1 // pred_region
      %905 = dma.done [#allocation6], 1024
    $region33: #{tpu_custom_call.1} parent=1 // pred_fallthru
      _
    // Predicated region
    $region34: #{tpu_custom_call.1} parent=1 // pred_check
      _
    $region35: #{tpu_custom_call.1} parent=1 // pred_check_branch
      %907 = sbr.rel (0) target = $region37
    $region36: #{tpu_custom_call.1} parent=1 // pred_region
      %908 = dma.done [#allocation9], 256
    $region37: #{tpu_custom_call.1} parent=1 // pred_fallthru
      _
    // Predicated region
    $region38: #{tpu_custom_call.1} parent=1 // pred_check
      _
    $region39: #{tpu_custom_call.1} parent=1 // pred_check_branch
      %910 = sbr.rel (0) target = $region41
    $region40: #{tpu_custom_call.1} parent=1 // pred_region
      %911 = dma.done [#allocation9], 256
    $region41: #{tpu_custom_call.1} parent=1 // pred_fallthru
      _
    %912 = vsyncpa [#allocation5], 1
    %913 = vsyncpa [#allocation6], 1
    %914 = vsyncpa [#allocation9], 1

</llo_original>
